<compile_context>
chip_gen: v5e
topology: v5e:2x2
jax: 0.10.0
libtpu: 0.0.40
codegen_flags: <defaults>
</compile_context>

<pallas_src>
import functools

import jax
import jax.numpy as jnp
from jax import lax
from jax.experimental import pallas as pl
from jax.experimental.pallas import tpu as pltpu


_NEG = -1e9  # logit padding value: exp(pad - max) underflows to exactly 0


def _round_up(x, m):
    return ((x + m - 1) // m) * m


def _focal_loss_kernel(x_ref, tgt_ref, at_ref, out_ref, acc_ref, *, gamma, n_valid):
    p = pl.program_id(0)            # core-split axis ("parallel")
    i = pl.program_id(1)            # N-tile axis ("arbitrary", reduction)
    steps = pl.num_programs(1)

    @pl.when(i == 0)
    def _():
        acc_ref[...] = jnp.zeros_like(acc_ref)

    x = x_ref[...].astype(jnp.float32)            # [TN, Cp] logits
    tgt = tgt_ref[...]                            # [TN, 1] int32 class ids
    alpha_t = at_ref[...].astype(jnp.float32)     # [TN, 1] per-sample alpha

    tn, cp = x.shape

    # --- log-softmax along classes: log p_t = x_t - logsumexp(x) ---
    m = jnp.max(x, axis=1, keepdims=True)                        # [TN, 1]
    sumexp = jnp.sum(jnp.exp(x - m), axis=1, keepdims=True)      # [TN, 1]
    logz = m + jnp.log(sumexp)                                   # [TN, 1]

    # one-hot gather of the target logit via iota compare (no scatter needed)
    col_ids = lax.broadcasted_iota(jnp.int32, (tn, cp), 1)       # [TN, Cp]
    onehot = col_ids == tgt                                      # [TN, Cp]
    x_t = jnp.sum(jnp.where(onehot, x, 0.0), axis=1, keepdims=True)  # [TN, 1]

    p_t = jnp.exp(x_t - logz)        # softmax(x)[target]
    probs = p_t + 1e-8               # matches the PyTorch formulation
    log_p = jnp.log(probs)

    one_minus = 1.0 - probs
    g = float(gamma)
    if g == int(g) and 0 <= int(g) <= 8:
        # integer gamma (default 2): repeated multiply, pure VALU, NaN-free
        pw = jnp.ones_like(one_minus)
        for _ in range(int(g)):
            pw = pw * one_minus
    else:
        # float gamma: clamp base to avoid exp(g*log(negative)) NaN
        pw = jnp.power(jnp.maximum(one_minus, 0.0), jnp.float32(g))

    batch_loss = -alpha_t * pw * log_p                           # [TN, 1]

    # mask out padded rows (rows >= n_valid contribute 0)
    row = (p * steps + i) * tn + lax.broadcasted_iota(jnp.int32, (tn, 1), 0)
    valid = (row < n_valid).astype(jnp.float32)
    acc_ref[...] += jnp.sum(batch_loss * valid)

    @pl.when(i == steps - 1)
    def _():
        # write this core's partial sum, broadcast over its (8,128) out block
        out_ref[...] = jnp.broadcast_to(acc_ref[...], out_ref.shape)


def focal_loss(inputs, targets, alpha, gamma=2.0, size_average=True, tile_n=512):
    """inputs: [N, C] float; targets: [N] int; alpha: [C] float."""
    n, c = inputs.shape
    targets = targets.astype(jnp.int32)

    # per-sample alpha gather done once by XLA; kernel sees [N, 1]
    alpha_t = jnp.asarray(alpha, jnp.float32).reshape(-1)[targets].reshape(n, 1)

    # pad classes to a lane-dense multiple of 128
    cp = _round_up(max(c, 128), 128)

    # row-tile size: multiple of 8, capped so double-buffered input blocks
    # stay well under the (v7x) VMEM budget
    itemsize = jnp.dtype(inputs.dtype).itemsize
    tn_cap = max(8, (8 * 1024 * 1024) // (2 * cp * itemsize))
    tn = min(_round_up(n, 8), _round_up(min(int(tile_n), tn_cap), 8))

    # 2-way leading "parallel" split (both TensorCores stream on dual-TC chips)
    steps = -(-n // (2 * tn))
    npad = 2 * steps * tn

    x_p = jnp.pad(inputs, ((0, npad - n), (0, cp - c)), constant_values=_NEG)
    tgt_p = jnp.pad(targets.reshape(n, 1), ((0, npad - n), (0, 0)))
    at_p = jnp.pad(alpha_t, ((0, npad - n), (0, 0)))

    kernel = functools.partial(_focal_loss_kernel, gamma=float(gamma), n_valid=n)

    partials = pl.pallas_call(
        kernel,
        out_shape=jax.ShapeDtypeStruct((16, 128), jnp.float32),
        grid_spec=pltpu.PrefetchScalarGridSpec(
            num_scalar_prefetch=0,
            grid=(2, steps),
            in_specs=[
                pl.BlockSpec((tn, cp), lambda p, i: (p * steps + i, 0)),  # logits
                pl.BlockSpec((tn, 1), lambda p, i: (p * steps + i, 0)),   # targets
                pl.BlockSpec((tn, 1), lambda p, i: (p * steps + i, 0)),   # alpha_t
            ],
            out_specs=pl.BlockSpec((8, 128), lambda p, i: (p, 0)),
            scratch_shapes=[pltpu.VMEM((1, 1), jnp.float32)],
        ),
        compiler_params=pltpu.CompilerParams(
            dimension_semantics=("parallel", "arbitrary")),
    )(x_p, tgt_p, at_p)

    total = partials[0, 0] + partials[8, 0]
    if size_average:
        total = total / jnp.float32(n)
    return total


def focal_loss_ref(inputs, targets, alpha, gamma=2.0, size_average=True):
    """Pure-JAX reference mirroring the PyTorch forward."""
    p = jax.nn.softmax(inputs.astype(jnp.float32), axis=1)
    n, c = inputs.shape
    one_hot = jax.nn.one_hot(targets, c, dtype=jnp.float32)
    probs = jnp.sum(p * one_hot, axis=1, keepdims=True) + 1e-8
    alpha_t = jnp.asarray(alpha, jnp.float32)[targets].reshape(n, 1)
    batch_loss = -alpha_t * jnp.power(1.0 - probs, gamma) * jnp.log(probs)
    return jnp.mean(batch_loss) if size_average else jnp.sum(batch_loss)


if __name__ == "__main__":
    key = jax.random.PRNGKey(0)

    # Test 1: the module's nominal small shape (FocalLoss(class_num=4, alpha=None))
    N, C = 8, 4
    k1, k2, k3, k4, k5 = jax.random.split(key, 5)
    inputs = jax.random.normal(k1, (N, C), dtype=jnp.float32)
    targets = jax.random.randint(k2, (N,), 0, C, dtype=jnp.int32)
    alpha = jnp.ones((C,), dtype=jnp.float32)

    loss = focal_loss(inputs, targets, alpha, gamma=2.0, size_average=True)
    loss = jax.block_until_ready(loss)
    ref = focal_loss_ref(inputs, targets, alpha, gamma=2.0, size_average=True)
    assert jnp.allclose(loss, ref, rtol=1e-5, atol=1e-6), (loss, ref)

    # Test 2: non-aligned N/C with multiple grid steps, non-uniform alpha, sum reduction
    N2, C2 = 50, 10
    inputs2 = jax.random.normal(k3, (N2, C2), dtype=jnp.float32)
    targets2 = jax.random.randint(k4, (N2,), 0, C2, dtype=jnp.int32)
    alpha2 = jax.random.uniform(k5, (C2,), dtype=jnp.float32) + 0.1

    loss2 = focal_loss(inputs2, targets2, alpha2, gamma=2.0, size_average=False,
                       tile_n=16)
    loss2 = jax.block_until_ready(loss2)
    ref2 = focal_loss_ref(inputs2, targets2, alpha2, gamma=2.0, size_average=False)
    assert jnp.allclose(loss2, ref2, rtol=1e-5, atol=1e-5), (loss2, ref2)

    print("KERNEL_OK")
</pallas_src>

<mosaic_0001>
module attributes {stable_mosaic.version = 11 : i64} {
  func.func @_focal_loss_kernel(%arg0: i32, %arg1: i32, %arg2: memref<8x128xf32, #tpu.memory_space<vmem>>, %arg3: memref<8x1xi32, #tpu.memory_space<vmem>>, %arg4: memref<8x1xf32, #tpu.memory_space<vmem>>, %arg5: memref<8x128xf32, #tpu.memory_space<vmem>>, %arg6: memref<1x1xf32, #tpu.memory_space<vmem>>) attributes {dimension_semantics = [#tpu.dimension_semantics<parallel>, #tpu.dimension_semantics<arbitrary>], iteration_bounds = array<i64: 2, 1>, scalar_prefetch = 0 : i64, scratch_operands = 1 : i64, tpu.core_type = #tpu.core_type<tc>, window_params = [{transform_indices = @transform_0, window_bounds = array<i64: 8, 128>}, {transform_indices = @transform_1, window_bounds = array<i64: 8, 1>}, {transform_indices = @transform_2, window_bounds = array<i64: 8, 1>}, {transform_indices = @transform_3, window_bounds = array<i64: 8, 128>}]} {
    %c0_i32 = arith.constant 0 : i32
    %0 = arith.cmpi eq, %arg1, %c0_i32 : i32
    %1 = arith.extui %0 : i1 to i32
    %c0_i32_0 = arith.constant 0 : i32
    %2 = arith.cmpi ne, %1, %c0_i32_0 : i32
    scf.if %2 {
      %cst_21 = arith.constant 0.000000e+00 : f32
      %58 = vector.broadcast %cst_21 : f32 to vector<1x1xf32>
      %c0_22 = arith.constant 0 : index
      %c0_23 = arith.constant 0 : index
      %59 = vector.load %arg6[%c0_22, %c0_23] : memref<1x1xf32, #tpu.memory_space<vmem>>, vector<1x1xf32>
      tpu.vector_store %arg6[%c0_22, %c0_23], %58 {strides = array<i32>} : memref<1x1xf32, #tpu.memory_space<vmem>>, vector<1x1xf32>,
    } else {
    }
    %c0 = arith.constant 0 : index
    %c0_1 = arith.constant 0 : index
    %3 = vector.load %arg2[%c0, %c0_1] : memref<8x128xf32, #tpu.memory_space<vmem>>, vector<8x128xf32>
    %c0_2 = arith.constant 0 : index
    %c0_3 = arith.constant 0 : index
    %4 = vector.load %arg3[%c0_2, %c0_3] : memref<8x1xi32, #tpu.memory_space<vmem>>, vector<8x1xi32>
    %c0_4 = arith.constant 0 : index
    %c0_5 = arith.constant 0 : index
    %5 = vector.load %arg4[%c0_4, %c0_5] : memref<8x1xf32, #tpu.memory_space<vmem>>, vector<8x1xf32>
    %cst = arith.constant dense<0xFF800000> : vector<8xf32>
    %6 = vector.multi_reduction <maximumf>, %3, %cst [1] : vector<8x128xf32> to vector<8xf32>
    %7 = vector.shape_cast %6 : vector<8xf32> to vector<8x1xf32>
    %8 = vector.broadcast %7 : vector<8x1xf32> to vector<8x128xf32>
    %9 = arith.subf %3, %8 : vector<8x128xf32>
    %10 = math.exp %9 : vector<8x128xf32>
    %cst_6 = arith.constant dense<0.000000e+00> : vector<8xf32>
    %11 = vector.multi_reduction <add>, %10, %cst_6 [1] : vector<8x128xf32> to vector<8xf32>
    %12 = vector.shape_cast %11 : vector<8xf32> to vector<8x1xf32>
    %13 = math.log %12 : vector<8x1xf32>
    %14 = arith.addf %7, %13 : vector<8x1xf32>
    %15 = tpu.iota {dimensions = array<i32: 1>} : vector<8x128xi32>
    %16 = vector.broadcast %4 : vector<8x1xi32> to vector<8x128xi32>
    %17 = arith.cmpi eq, %15, %16 : vector<8x128xi32>
    %cst_7 = arith.constant 0.000000e+00 : f32
    %18 = vector.broadcast %cst_7 : f32 to vector<8x128xf32>
    %19 = arith.select %17, %3, %18 : vector<8x128xi1>, vector<8x128xf32>
    %cst_8 = arith.constant dense<0.000000e+00> : vector<8xf32>
    %20 = vector.multi_reduction <add>, %19, %cst_8 [1] : vector<8x128xf32> to vector<8xf32>
    %21 = vector.shape_cast %20 : vector<8xf32> to vector<8x1xf32>
    %22 = arith.subf %21, %14 : vector<8x1xf32>
    %23 = math.exp %22 : vector<8x1xf32>
    %cst_9 = arith.constant 9.99999993E-9 : f32
    %24 = vector.broadcast %cst_9 : f32 to vector<8x1xf32>
    %25 = arith.addf %23, %24 : vector<8x1xf32>
    %26 = math.log %25 : vector<8x1xf32>
    %cst_10 = arith.constant 1.000000e+00 : f32
    %27 = vector.broadcast %cst_10 : f32 to vector<8x1xf32>
    %28 = arith.subf %27, %25 : vector<8x1xf32>
    %cst_11 = arith.constant 1.000000e+00 : f32
    %29 = vector.broadcast %cst_11 : f32 to vector<8x1xf32>
    %30 = arith.mulf %29, %28 : vector<8x1xf32>
    %31 = arith.mulf %30, %28 : vector<8x1xf32>
    %cst_12 = arith.constant 0.000000e+00 : f32
    %32 = vector.broadcast %cst_12 : f32 to vector<8x1xf32>
    %33 = arith.subf %32, %5 : vector<8x1xf32>
    %34 = arith.mulf %33, %31 : vector<8x1xf32>
    %35 = arith.mulf %34, %26 : vector<8x1xf32>
    %c1_i32 = arith.constant 1 : i32
    %36 = arith.muli %arg0, %c1_i32 : i32
    %37 = arith.addi %36, %arg1 : i32
    %c8_i32 = arith.constant 8 : i32
    %38 = arith.muli %37, %c8_i32 : i32
    %39 = tpu.iota {dimensions = array<i32: 0>} : vector<8x1xi32>
    %40 = vector.broadcast %38 : i32 to vector<8x1xi32>
    %41 = arith.addi %40, %39 : vector<8x1xi32>
    %c8_i32_13 = arith.constant 8 : i32
    %42 = vector.broadcast %c8_i32_13 : i32 to vector<8x1xi32>
    %43 = arith.cmpi slt, %41, %42 : vector<8x1xi32>
    %44 = arith.extui %43 : vector<8x1xi1> to vector<8x1xi32>
    %45 = arith.sitofp %44 : vector<8x1xi32> to vector<8x1xf32>
    %c0_14 = arith.constant 0 : index
    %c0_15 = arith.constant 0 : index
    %46 = vector.load %arg6[%c0_14, %c0_15] : memref<1x1xf32, #tpu.memory_space<vmem>>, vector<1x1xf32>
    %47 = arith.mulf %35, %45 : vector<8x1xf32>
    %48 = vector.shape_cast %47 : vector<8x1xf32> to vector<1x8x1xf32>
    %cst_16 = arith.constant dense<0.000000e+00> : vector<1xf32>
    %49 = vector.multi_reduction <add>, %48, %cst_16 [1, 2] : vector<1x8x1xf32> to vector<1xf32>
    %50 = vector.shape_cast %49 : vector<1xf32> to vector<1x1x1xf32>
    %51 = vector.extract %50[0, 0, 0] : f32 from vector<1x1x1xf32>
    %52 = vector.broadcast %51 : f32 to vector<1x1xf32>
    %53 = arith.addf %46, %52 : vector<1x1xf32>
    %c0_17 = arith.constant 0 : index
    %c0_18 = arith.constant 0 : index
    %54 = vector.load %arg6[%c0_17, %c0_18] : memref<1x1xf32, #tpu.memory_space<vmem>>, vector<1x1xf32>
    tpu.vector_store %arg6[%c0_17, %c0_18], %53 {strides = array<i32>} : memref<1x1xf32, #tpu.memory_space<vmem>>, vector<1x1xf32>,
    %c0_i32_19 = arith.constant 0 : i32
    %55 = arith.cmpi eq, %arg1, %c0_i32_19 : i32
    %56 = arith.extui %55 : i1 to i32
    %c0_i32_20 = arith.constant 0 : i32
    %57 = arith.cmpi ne, %56, %c0_i32_20 : i32
    scf.if %57 {
      %c0_21 = arith.constant 0 : index
      %c0_22 = arith.constant 0 : index
      %58 = vector.load %arg6[%c0_21, %c0_22] : memref<1x1xf32, #tpu.memory_space<vmem>>, vector<1x1xf32>
      %59 = vector.shape_cast %58 : vector<1x1xf32> to vector<1x1xf32>
      %60 = vector.broadcast %59 : vector<1x1xf32> to vector<8x128xf32>
      %c0_23 = arith.constant 0 : index
      %c0_24 = arith.constant 0 : index
      %61 = vector.load %arg5[%c0_23, %c0_24] : memref<8x128xf32, #tpu.memory_space<vmem>>, vector<8x128xf32>
      tpu.vector_store %arg5[%c0_23, %c0_24], %60 {strides = array<i32>} : memref<8x128xf32, #tpu.memory_space<vmem>>, vector<8x128xf32>,
    } else {
    }
    return
  }
  func.func @transform_0(%arg0: i32, %arg1: i32) -> (i32, i32) {
    %c1_i32 = arith.constant 1 : i32
    %0 = arith.muli %arg0, %c1_i32 : i32
    %1 = arith.addi %0, %arg1 : i32
    %c0_i32 = arith.constant 0 : i32
    %c0_i32_0 = arith.constant 0 : i32
    return %1, %c0_i32 : i32, i32
  }
  func.func @transform_1(%arg0: i32, %arg1: i32) -> (i32, i32) {
    %c1_i32 = arith.constant 1 : i32
    %0 = arith.muli %arg0, %c1_i32 : i32
    %1 = arith.addi %0, %arg1 : i32
    %c0_i32 = arith.constant 0 : i32
    %c0_i32_0 = arith.constant 0 : i32
    return %1, %c0_i32 : i32, i32
  }
  func.func @transform_2(%arg0: i32, %arg1: i32) -> (i32, i32) {
    %c1_i32 = arith.constant 1 : i32
    %0 = arith.muli %arg0, %c1_i32 : i32
    %1 = arith.addi %0, %arg1 : i32
    %c0_i32 = arith.constant 0 : i32
    %c0_i32_0 = arith.constant 0 : i32
    return %1, %c0_i32 : i32, i32
  }
  func.func @transform_3(%arg0: i32, %arg1: i32) -> (i32, i32) {
    %c0_i32 = arith.constant 0 : i32
    %c0_i32_0 = arith.constant 0 : i32
    return %arg0, %c0_i32 : i32, i32
  }
}

</mosaic_0001>

<llo_original>
// kernel: tpu_custom_call.1
$region0: #{tpu_custom_call.1}
  #allocation0 [shape = 'u32[]', space=smem, size = 0x4, offset = 0x4, fixed_abs, tag = 'smem constant byte address 0x4 - core index']
  #allocation1 [shape = 'u32[72,128]{1,0:T(1,128)}', space=vmem, size = 0x9000, scoped, tag = 'internal scratch']
  #allocation2 [shape = 'f32[1,1]{1,0:T(1,128)}', space=vmem, size = 0x200, scoped, tag = 'scratch operand']
  %s0 = inlined_call_operand.vmem [shape: f32[16,128], index: 0, kind: input, shape index: {}]
  %s1 = inlined_call_operand.vmem [shape: s32[16,1], index: 1, kind: input, shape index: {}]
  %s2 = inlined_call_operand.vmem [shape: f32[16,1], index: 2, kind: input, shape index: {}]
  %s3 = inlined_call_operand.hbm [shape: f32[16,128], index: 3, kind: output, shape index: {}]
  %s4 = sld [smem:[#allocation0]]
  $region53: #{tpu_custom_call.1} parent=0
    _
  %s6 = ssub.s32 1, %s4
  %s7 = scalar_select 0, %s6, %s4
  $region1: #{tpu_custom_call.1} parent=0
    #allocation3 [shape = 'u8[8192]{0}', space=vmem, size = 0x2000, scoped, tag = 'output window, operand 0']
    #allocation4 [shape = 's32[2]{0}', space=sflag, size = 0x8, scoped, tag = 'scoped memory for tpu_custom_call.1']
    %8 = vsyncpa [#allocation4], 0
    %s9 = scalar_lea.sflag [#allocation4], 1
    %10 = vsyncpa %s9, 0
    loop: start=0, step=1, limit=4
    $region2: #{tpu_custom_call.1} parent=1 // loop_pre_header
      _
    $region3: #{tpu_custom_call.1} parent=1 // loop_header
      %s12 = sphi 0, %s16
      %p13 = scmp.ge.s32.totalorder %s12, 4
      %s19 = sphi 0, %s31
      %s20 = sphi 0, %s27
      %s21 = sphi 0, %s19
      %s22 = sphi 0, %s20
      %s23 = sphi 0, %s21
      %s24 = sphi 0, %s22
      %s36 = sphi 0, %s38
      %s39 = sphi 0, %s36
      %s40 = sphi 0, %s39
      %s56 = sphi 0, %s40
      %s64 = sphi 0, %s66
      %s67 = sphi 0, %s64
      %s68 = sphi 0, %s67
      %s84 = sphi 0, %s68
      %s92 = sphi 0, %s94
      %s95 = sphi 0, %s92
      %s96 = sphi 0, %s95
      %s112 = sphi 0, %s96
      %s118 = sphi 0, %s120
      %s121 = sphi 0, %s118
      %s122 = sphi 0, %s121
      %s138 = sphi 0, %s122
    $region4: #{tpu_custom_call.1} parent=1 // loop_header_branch
      %15 = sbr.rel (%p13) target = $region8
    $region5: #{tpu_custom_call.1} parent=1 // loop_body
      %s17 = ssub.s32 %s12, 1
      %s18 = ssub.s32 %s12, 2
      %s25 = sadd.s32 1, %s20
      %p26 = scmp.ge.s32.totalorder %s25, 1
      %s27 = scalar_select %p26, 0, %s25
      %s28 = sadd.s32 1, %s19
      %s29 = scalar_select %p26, %s28, %s19
      %p30 = scmp.ge.s32.totalorder %s29, 2
      %s31 = scalar_select %p30, 0, %s29
      %s32 = sadd.s32 %s19, %s20
      %s33 = sadd.s32 %s31, %s27
      %s34 = ssub.s32 %s32, %s33
      %p35 = scmp.eq.s32.totalorder %s34, 0
      %s37 = sadd.s32 %s36, 1
      %s38 = scalar_select %p35, %s36, %s37
      %p41 = pneg %p35
      %p42 = scmp.eq.s32.totalorder %s12, 1
      %p43 = por %p41, %p42
      %p44 = scmp.ne.s32.totalorder %s36, %s39
      %p45 = scmp.eq.s32.totalorder %s12, 0
      %p46 = por %p44, %p45
      %p47 = scmp.ne.s32.totalorder %s36, %s39
      %p48 = scmp.eq.s32.totalorder %s17, 1
      %p49 = por %p47, %p48
      %p50 = scmp.ne.s32.totalorder %s39, %s40
      %p51 = scmp.eq.s32.totalorder %s17, 0
      %p52 = por %p50, %p51
      %p53 = scmp.ne.s32.totalorder %s39, %s40
      %p54 = scmp.eq.s32.totalorder %s18, 1
      %p55 = por %p53, %p54
      %p57 = scmp.ne.s32.totalorder %s40, %s56
      %p58 = scmp.eq.s32.totalorder %s18, 0
      %p59 = por %p57, %p58
      %s60 = sadd.s32 %s19, %s20
      %s61 = sadd.s32 %s31, %s27
      %s62 = ssub.s32 %s60, %s61
      %p63 = scmp.eq.s32.totalorder %s62, 0
      %s65 = sadd.s32 %s64, 1
      %s66 = scalar_select %p63, %s64, %s65
      %p69 = pneg %p63
      %p70 = scmp.eq.s32.totalorder %s12, 1
      %p71 = por %p69, %p70
      %p72 = scmp.ne.s32.totalorder %s64, %s67
      %p73 = scmp.eq.s32.totalorder %s12, 0
      %p74 = por %p72, %p73
      %p75 = scmp.ne.s32.totalorder %s64, %s67
      %p76 = scmp.eq.s32.totalorder %s17, 1
      %p77 = por %p75, %p76
      %p78 = scmp.ne.s32.totalorder %s67, %s68
      %p79 = scmp.eq.s32.totalorder %s17, 0
      %p80 = por %p78, %p79
      %p81 = scmp.ne.s32.totalorder %s67, %s68
      %p82 = scmp.eq.s32.totalorder %s18, 1
      %p83 = por %p81, %p82
      %p85 = scmp.ne.s32.totalorder %s68, %s84
      %p86 = scmp.eq.s32.totalorder %s18, 0
      %p87 = por %p85, %p86
      %s88 = sadd.s32 %s19, %s20
      %s89 = sadd.s32 %s31, %s27
      %s90 = ssub.s32 %s88, %s89
      %p91 = scmp.eq.s32.totalorder %s90, 0
      %s93 = sadd.s32 %s92, 1
      %s94 = scalar_select %p91, %s92, %s93
      %p97 = pneg %p91
      %p98 = scmp.eq.s32.totalorder %s12, 1
      %p99 = por %p97, %p98
      %p100 = scmp.ne.s32.totalorder %s92, %s95
      %p101 = scmp.eq.s32.totalorder %s12, 0
      %p102 = por %p100, %p101
      %p103 = scmp.ne.s32.totalorder %s92, %s95
      %p104 = scmp.eq.s32.totalorder %s17, 1
      %p105 = por %p103, %p104
      %p106 = scmp.ne.s32.totalorder %s95, %s96
      %p107 = scmp.eq.s32.totalorder %s17, 0
      %p108 = por %p106, %p107
      %p109 = scmp.ne.s32.totalorder %s95, %s96
      %p110 = scmp.eq.s32.totalorder %s18, 1
      %p111 = por %p109, %p110
      %p113 = scmp.ne.s32.totalorder %s96, %s112
      %p114 = scmp.eq.s32.totalorder %s18, 0
      %p115 = por %p113, %p114
      %s116 = ssub.s32 %s19, %s31
      %p117 = scmp.eq.s32.totalorder %s116, 0
      %s119 = sadd.s32 %s118, 1
      %s120 = scalar_select %p117, %s118, %s119
      %p123 = pneg %p117
      %p124 = scmp.eq.s32.totalorder %s12, 1
      %p125 = por %p123, %p124
      %p126 = scmp.ne.s32.totalorder %s118, %s121
      %p127 = scmp.eq.s32.totalorder %s12, 0
      %p128 = por %p126, %p127
      %p129 = scmp.ne.s32.totalorder %s118, %s121
      %p130 = scmp.eq.s32.totalorder %s17, 1
      %p131 = por %p129, %p130
      %p132 = scmp.ne.s32.totalorder %s121, %s122
      %p133 = scmp.eq.s32.totalorder %s17, 0
      %p134 = por %p132, %p133
      %p135 = scmp.ne.s32.totalorder %s121, %s122
      %p136 = scmp.eq.s32.totalorder %s18, 1
      %p137 = por %p135, %p136
      %p139 = scmp.ne.s32.totalorder %s122, %s138
      %p140 = scmp.eq.s32.totalorder %s18, 0
      %p141 = por %p139, %p140
      %p142 = scmp.le.s32.totalorder 1, %s12
      %p143 = scmp.lt.s32.totalorder %s12, 3
      %p144 = pnand %p142, %p143
      %p145 = pneg %p144
      // Predicated region
      $region9: #{tpu_custom_call.1} parent=5 // pred_check
        _
      $region10: #{tpu_custom_call.1} parent=5 // pred_check_branch
        %147 = sbr.rel (%p144) target = $region12
      $region11: #{tpu_custom_call.1} parent=5 // pred_region
        %s148 = ssub.s32 %s12, 1
      $region12: #{tpu_custom_call.1} parent=5 // pred_fallthru
        _
      %p149 = scmp.lt.s32.totalorder %s12, 2
      // Predicated region
      $region13: #{tpu_custom_call.1} parent=5 // pred_check
        %p150 = pneg %p149
      $region14: #{tpu_custom_call.1} parent=5 // pred_check_branch
        %152 = sbr.rel (%p150) target = $region16
      $region15: #{tpu_custom_call.1} parent=5 // pred_region
        // Predicated region
        $region17: #{tpu_custom_call.1} parent=15 // pred_check
          %p153 = pneg %p46
        $region18: #{tpu_custom_call.1} parent=15 // pred_check_branch
          %155 = sbr.rel (%p153) target = $region20
        $region19: #{tpu_custom_call.1} parent=15 // pred_region
          %s156 = sadd.s32 %s19, %s20
          %p157 = scmp.lt.s32.totalorder %s156, 1
          %s158 = scalar_select %p157, %s156, 1
          %s159 = smul.addr %s158, 8
          %s160 = scalar_lea.vmem %s0, %s159
          %s161 = sadd.s32 %s19, %s20
        $region20: #{tpu_custom_call.1} parent=15 // pred_fallthru
          _
        // Predicated region
        $region21: #{tpu_custom_call.1} parent=15 // pred_check
          %p162 = pneg %p74
        $region22: #{tpu_custom_call.1} parent=15 // pred_check_branch
          %164 = sbr.rel (%p162) target = $region24
        $region23: #{tpu_custom_call.1} parent=15 // pred_region
          %s165 = sadd.s32 %s19, %s20
          %p166 = scmp.lt.s32.totalorder %s165, 1
          %s167 = scalar_select %p166, %s165, 1
          %s168 = smul.addr %s167, 8
          %s169 = scalar_lea.vmem %s1, %s168
          %s170 = sadd.s32 %s19, %s20
        $region24: #{tpu_custom_call.1} parent=15 // pred_fallthru
          _
        // Predicated region
        $region25: #{tpu_custom_call.1} parent=15 // pred_check
          %p171 = pneg %p102
        $region26: #{tpu_custom_call.1} parent=15 // pred_check_branch
          %173 = sbr.rel (%p171) target = $region28
        $region27: #{tpu_custom_call.1} parent=15 // pred_region
          %s174 = sadd.s32 %s19, %s20
          %p175 = scmp.lt.s32.totalorder %s174, 1
          %s176 = scalar_select %p175, %s174, 1
          %s177 = smul.addr %s176, 8
          %s178 = scalar_lea.vmem %s2, %s177
          %s179 = sadd.s32 %s19, %s20
        $region28: #{tpu_custom_call.1} parent=15 // pred_fallthru
          _
      $region16: #{tpu_custom_call.1} parent=5 // pred_fallthru
        _
      %p180 = scmp.le.s32.totalorder 1, %s12
      %p181 = scmp.lt.s32.totalorder %s12, 3
      %p182 = pnand %p180, %p181
      %p183 = pneg %p182
      // Predicated region
      $region29: #{tpu_custom_call.1} parent=5 // pred_check
        _
      $region30: #{tpu_custom_call.1} parent=5 // pred_check_branch
        %185 = sbr.rel (%p182) target = $region32
      $region31: #{tpu_custom_call.1} parent=5 // pred_region
        %s186 = ssub.s32 %s12, 1
        %s187 = sadd.s32 %s21, %s22
        %p188 = scmp.lt.s32.totalorder %s187, 1
        %s189 = scalar_select %p188, %s187, 1
        %s190 = smul.addr %s189, 8
        %s191 = scalar_lea.vmem %s0, %s190
        %p192 = pneg %p52
        %p193 = pneg %p49
        %s194 = sadd.s32 %s21, %s22
        %p195 = scmp.lt.s32.totalorder %s194, 1
        %s196 = scalar_select %p195, %s194, 1
        %s197 = smul.addr %s196, 8
        %s198 = scalar_lea.vmem %s1, %s197
        %p199 = pneg %p80
        %p200 = pneg %p77
        %s201 = sadd.s32 %s21, %s22
        %p202 = scmp.lt.s32.totalorder %s201, 1
        %s203 = scalar_select %p202, %s201, 1
        %s204 = smul.addr %s203, 8
        %s205 = scalar_lea.vmem %s2, %s204
        %p206 = pneg %p108
        %p207 = pneg %p105
        %p208 = pneg %p134
        %p209 = pneg %p131
        %s210 = sand.u32 %s121, 1
        %s211 = scalar_lea.sflag [#allocation4], %s210
        %s212 = sand.u32 %s121, 1
        %s213 = smul.addr %s212, 8
        %s214 = scalar_lea.vmem [#allocation3], %s213
        %s215 = sadd.s32 %s21, %s22
        %p216 = scmp.lt.s32.totalorder %s215, 1
        %s217 = scalar_select %p216, %s215, 1
        %s218 = smul.addr %s217, 8
        %s219 = scalar_lea.vmem %s0, %s218
        %s220 = sadd.s32 %s21, %s22
        %s221 = sadd.s32 %s21, %s22
        %p222 = scmp.lt.s32.totalorder %s221, 1
        %s223 = scalar_select %p222, %s221, 1
        %s224 = smul.addr %s223, 8
        %s225 = scalar_lea.vmem %s1, %s224
        %s226 = sadd.s32 %s21, %s22
        %s227 = sadd.s32 %s21, %s22
        %p228 = scmp.lt.s32.totalorder %s227, 1
        %s229 = scalar_select %p228, %s227, 1
        %s230 = smul.addr %s229, 8
        %s231 = scalar_lea.vmem %s2, %s230
        %s232 = sadd.s32 %s21, %s22
        %p233 = scmp.eq.s32.totalorder %s22, 0
        // Predicated region
        $region33: #{tpu_custom_call.1} parent=31 // pred_check
          %p234 = pneg %p233
        $region34: #{tpu_custom_call.1} parent=31 // pred_check_branch
          %236 = sbr.rel (%p234) target = $region36
        $region35: #{tpu_custom_call.1} parent=31 // pred_region
          %vm237 = vcmask 0
          %238 = vst.msk [vmem:[#allocation2] sm:$0x1] %vm237, 0.0
        $region36: #{tpu_custom_call.1} parent=31 // pred_fallthru
          _
        %v239 = vld [vmem:[%s219] sm:$0xff]
        %v240 = vld [vmem:[%s225] sm:$0xff]
        %v241 = vld [vmem:[%s231] sm:$0xff]
        %242 = vmax.xlane.f32.xlu0 %v239
        %v243 = vpop.xlane.xlu0 %242
        %v244 = vsub.f32 %v239, %v243
        %v245 = vmul.f32 %v244, 1.442695
        %v246 = vpow.pop %v245
        %247 = vadd.xlane.f32.xlu0 %v246
        %v248 = vpop.xlane.xlu0 %247
        %v249 = vlog2.pop %v248
        %v250 = vmul.f32 %v249, 0.6931472
        %v251 = vadd.f32 %v243, %v250
        %v252 = vlaneseq
        %v253 = vand.u32 %v252, 127
        %254 = vset.pattern.permute.xlu0 0
        %255 = vperm.xlu0 %254, %v240
        %v256 = vpop.permute.xlu0 %255
        %vm257 = vcmp.eq.s32.totalorder %v253, %v256
        %v258 = vsel %vm257, %v239, 0.0
        %259 = vadd.xlane.f32.xlu0 %v258
        %v260 = vpop.xlane.xlu0 %259
        %v261 = vsub.f32 %v260, %v251
        %v262 = vmul.f32 %v261, 1.442695
        %v263 = vpow.pop %v262
        %v264 = vadd.f32 %v263, 1e-08
        %v265 = vlog2.pop %v264
        %v266 = vmul.f32 %v265, 0.6931472
        %v267 = vsub.f32 1.0, %v264
        %v268 = vmul.f32 %v267, %v267
        %v269 = vsub.f32 0.0, %v241
        %v270 = vmul.f32 %v269, %v268
        %v271 = vmul.f32 %v270, %v266
        %s272 = sadd.s32 %s21, %s22
        %s273 = smul.u32 %s272, 8
        %v274 = vlaneseq
        %v275 = vshrl.u32 %v274, 7
        %v276 = vstv %s273
        %v277 = vadd.s32 %v276, %v275
        %vm278 = vcmp.lt.s32.totalorder %v277, 8
        %v279 = vsel %vm278, 1, 0
        %v280 = vcvt.s32.f32 %v279
        %v281 = vld [vmem:[#allocation2] sm:$0x1]
        %v282 = vmul.f32 %v271, %v280
        %vm283 = vcmask 7168
        %v284 = vsel %vm283, %v282, 0.0
        %285 = vadd.xlane.f32.xlu0 %v284
        %v286 = vpop.xlane.xlu0 %285
        %v287 = vrot.slane %v286, 4
        %v288 = vadd.f32 %v286, %v287
        %v289 = vrot.slane %v288, 2
        %v290 = vadd.f32 %v288, %v289
        %v291 = vrot.slane %v290, 1
        %v292 = vadd.f32 %v290, %v291
        %s293 = vtos %v292
        %v294 = vstv %s293
        %v295 = vadd.f32 %v281, %v294
        %vm296 = vcmask 0
        %297 = vst.msk [vmem:[#allocation2] sm:$0x1] %vm296, %v295
        // Predicated region
        $region37: #{tpu_custom_call.1} parent=31 // pred_check
          %p298 = pneg %p233
        $region38: #{tpu_custom_call.1} parent=31 // pred_check_branch
          %300 = sbr.rel (%p298) target = $region40
        $region39: #{tpu_custom_call.1} parent=31 // pred_region
          %v301 = vld [vmem:[#allocation2] sm:$0x1]
          %v303 = vperm.slane %v301, 0
          %304 = vset.pattern.permute.xlu0 0
          %305 = vperm.xlu0 %304, %v303
          %v306 = vpop.permute.xlu0 %305
          %308 = vst [vmem:[%s214] sm:$0xff] %v306
        $region40: #{tpu_custom_call.1} parent=31 // pred_fallthru
          _
        %s309 = sand.u32 %s121, 1
        %s310 = scalar_lea.sflag [#allocation4], %s309
        %s311 = sand.u32 %s121, 1
        %s312 = smul.addr %s311, 8
        %s313 = scalar_lea.vmem [#allocation3], %s312
        // Predicated region
        $region41: #{tpu_custom_call.1} parent=31 // pred_check
          %p314 = pneg %p131
        $region42: #{tpu_custom_call.1} parent=31 // pred_check_branch
          %316 = sbr.rel (%p314) target = $region44
        $region43: #{tpu_custom_call.1} parent=31 // pred_region
          %318 = vsyncadd %s310, 0
          %s319 = smul.addr %s21, 8
          %s320 = scalar_lea.hbm %s3, %s319
          %s322 = sshll.u32 %s313, 4
          %s323 = int_to_ptr.vmem [resolvable:$true] %s322
          %s324 = sshll.u32 %s320, 4
          %s325 = int_to_ptr.hbm [resolvable:$true] %s324
          %327 = dma.vmem_to_hbm [thread:$0]  %s323, 128, %s325, %s310
        $region44: #{tpu_custom_call.1} parent=31 // pred_fallthru
          _
      $region32: #{tpu_custom_call.1} parent=5 // pred_fallthru
        _
      %p328 = scmp.le.s32.totalorder 2, %s12
      // Predicated region
      $region45: #{tpu_custom_call.1} parent=5 // pred_check
        %p329 = pneg %p328
      $region46: #{tpu_custom_call.1} parent=5 // pred_check_branch
        %331 = sbr.rel (%p329) target = $region48
      $region47: #{tpu_custom_call.1} parent=5 // pred_region
        %s332 = ssub.s32 %s12, 2
        // Predicated region
        $region49: #{tpu_custom_call.1} parent=47 // pred_check
          %p333 = pneg %p137
        $region50: #{tpu_custom_call.1} parent=47 // pred_check_branch
          %335 = sbr.rel (%p333) target = $region52
        $region51: #{tpu_custom_call.1} parent=47 // pred_region
          %s336 = sand.u32 %s122, 1
          %s337 = scalar_lea.sflag [#allocation4], %s336
          %s338 = sand.u32 %s122, 1
          %s339 = smul.addr %s338, 8
          %s340 = scalar_lea.vmem [#allocation3], %s339
          %342 = dma.done %s337, 128
        $region52: #{tpu_custom_call.1} parent=47 // pred_fallthru
          _
      $region48: #{tpu_custom_call.1} parent=5 // pred_fallthru
        _
    $region6: #{tpu_custom_call.1} parent=1 // loop_footer
      %s16 = sadd.s32 1, %s12
    $region7: #{tpu_custom_call.1} parent=1 // loop_footer_branch
      %11 = sbr.rel target = $region3
    $region8: #{tpu_custom_call.1} parent=1 // loop_exit
      _
    %343 = vsyncpa [#allocation4], 1
    %s344 = scalar_lea.sflag [#allocation4], 1
    %345 = vsyncpa %s344, 1

</llo_original>
